<compile_context>
chip_gen: v7x
topology: tpu7x:2x2x1
jax: 0.10.0
libtpu: 0.0.40
codegen_flags: <defaults>
</compile_context>

<pallas_src>
import jax
import jax.numpy as jnp
from jax.experimental import pallas as pl
from jax.experimental.pallas import tpu as pltpu


# ---------------------------------------------------------------------------
# Pallas kernel body: straight element copy of the current (tile_rows, lane)
# block.  With identity index maps and input/output aliasing this is the
# closest a materializing kernel can get to true .view() semantics.
# ---------------------------------------------------------------------------
def _copy_kernel(x_ref, o_ref):
    o_ref[...] = x_ref[...]


def _tile_policy(total_bytes):
    """Generation-aware (target tile bytes, minimum grid steps)."""
    kind = ""
    try:
        kind = jax.devices()[0].device_kind.lower()
    except Exception:  # pragma: no cover - defensive; fall back to defaults
        pass
    if "7" in kind:          # v7x: ~3.2 TB/s HBM, 64 MiB VMEM, 2 TensorCores
        target, cores = 8 << 20, 2
    elif "6" in kind:        # v6e: ~1.4 TB/s, 128 MiB VMEM, 1 TC
        target, cores = 4 << 20, 1
    elif "5" in kind:        # v5e: ~0.8 TB/s, 128 MiB VMEM (16 MiB scoped), 1 TC
        target, cores = 2 << 20, 1
    else:
        target, cores = 4 << 20, 1
    # Guarantee >=2 grid steps on multi-TC chips for mid/large tensors so the
    # "parallel" grid axis actually shards across both TensorCores.
    min_blocks = 2 if (cores > 1 and total_bytes > (4 << 20)) else 1
    return target, min_blocks


def _pick_lane_width(total, sublane_mult):
    """Widest lane width (multiple of 128) dividing `total`.

    Prefer factorings where rows is a multiple of the dtype-aware sublane
    packing (8 f32 / 16 bf16 / 32 int8) -> fully packed vregs, unmasked
    lane-dense vld/vst.  Among those, prefer the widest lane.
    """
    candidates = (32768, 16384, 8192, 4096, 2048, 1024, 512, 256, 128)
    for lane in candidates:
        if total % lane == 0 and (total // lane) % sublane_mult == 0:
            return lane
    for lane in candidates:
        if total % lane == 0:
            return lane
    return None  # no 128-divisible factoring


def _pick_tile_rows(rows, lane, itemsize, target_bytes, sublane_mult, min_blocks):
    """Row tile: multiple of sublane_mult, ~target_bytes per tile.

    Never degrades to tiny tiles: accepted clean divisors are floored at
    ~half the target size; otherwise one masked partial tail block is used.
    """
    max_rows = max(
        sublane_mult,
        ((target_bytes // (lane * itemsize)) // sublane_mult) * sublane_mult,
    )
    if min_blocks > 1:
        cap = max(sublane_mult, ((rows // min_blocks) // sublane_mult) * sublane_mult)
        max_rows = min(max_rows, cap)
    if rows <= max_rows:
        return rows  # full rows extent (always legal)
    # Prefer a clean divisor of rows, but never below max_rows // 2.
    floor_t = max(sublane_mult, ((max_rows // 2) // sublane_mult) * sublane_mult)
    t = max_rows
    while t >= floor_t:
        if rows % t == 0:
            return t
        t -= sublane_mult
    return max_rows  # accept one masked partial last block


def _pallas_identity_copy(x2, tile_rows):
    """Tiled identity copy of a (rows, lane) array through VMEM."""
    rows, lane = x2.shape
    itemsize = jnp.dtype(x2.dtype).itemsize
    tile_bytes = tile_rows * lane * itemsize
    # Double-buffered pipeline: 2 buffers each for input and output, + headroom.
    # Clamp well below v7x's 64 MiB physical VMEM.
    vmem_limit = int(min(max(4 * tile_bytes + (1 << 20), 8 << 20), 48 << 20))
    grid = (pl.cdiv(rows, tile_rows),)

    return pl.pallas_call(
        _copy_kernel,
        out_shape=jax.ShapeDtypeStruct((rows, lane), x2.dtype),
        grid_spec=pltpu.PrefetchScalarGridSpec(
            num_scalar_prefetch=0,
            grid=grid,
            in_specs=[pl.BlockSpec((tile_rows, lane), lambda i: (i, 0))],
            out_specs=pl.BlockSpec((tile_rows, lane), lambda i: (i, 0)),
        ),
        # Identity per block -> aliasing input 0 to output 0 is safe and lets
        # XLA reuse/donate the input buffer when this is fused inside a jit.
        input_output_aliases={0: 0},
        compiler_params=pltpu.CompilerParams(
            dimension_semantics=("parallel",),
            vmem_limit_bytes=vmem_limit,
        ),
    )(x2)


# ---------------------------------------------------------------------------
# Public API
# ---------------------------------------------------------------------------
def review(x, channel, sizes):
    """Hot-path equivalent of Review(channel, sizes).forward(x).

    torch .view() on a contiguous tensor is metadata-only, so the optimal
    implementation is a bare reshape: no HBM traffic, no kernel launch.
    """
    batch = x.shape[0]
    out_shape = (batch, channel, sizes[0], sizes[1])
    assert x.size == batch * channel * sizes[0] * sizes[1], "shape mismatch for view"
    return jnp.reshape(x, out_shape)


def review_pallas(x, channel, sizes):
    """Pallas-backed variant: materializes the reshaped tensor via a
    lane-dense, sublane-full tiled identity copy (kernel deliverable)."""
    batch = x.shape[0]
    out_shape = (batch, channel, sizes[0], sizes[1])
    total = x.size
    assert total == batch * channel * sizes[0] * sizes[1], "shape mismatch for view"

    itemsize = jnp.dtype(x.dtype).itemsize
    sublane_mult = 8 * max(1, 4 // itemsize)  # 8 f32 / 16 bf16 / 32 int8

    lane = _pick_lane_width(total, sublane_mult)
    if lane is None:
        # Element count has no factor of 128: the copy kernel would need a
        # padded path; the metadata-only reshape is strictly better.
        # TODO(synk): pad-and-slice copy path if a materialized copy is ever
        # required for non-128-divisible element counts.
        return jnp.reshape(x, out_shape)

    rows = total // lane
    target_bytes, min_blocks = _tile_policy(total * itemsize)
    tile_rows = _pick_tile_rows(rows, lane, itemsize, target_bytes,
                                sublane_mult, min_blocks)

    x2 = jnp.reshape(x, (rows, lane))              # glue: metadata-only
    y2 = _pallas_identity_copy(x2, tile_rows)      # Pallas: tiled identity copy
    return jnp.reshape(y2, out_shape)              # glue: metadata-only


if __name__ == "__main__":
    # Small shapes consistent with the module: batch=2, channel=4, sizes=(16,16)
    batch, channel, sizes = 2, 4, (16, 16)
    key = jax.random.PRNGKey(0)
    # Typical usage: output of a Linear layer, shape (batch, channel*H*W)
    x = jax.random.normal(key, (batch, channel * sizes[0] * sizes[1]),
                          dtype=jnp.float32)

    # Reference: pure-JAX reshape (== torch .view semantics)
    ref = jnp.reshape(x, (batch, channel, sizes[0], sizes[1]))
    ref = jax.block_until_ready(ref)

    # Hot path (metadata-only reshape).
    out_fast = jax.block_until_ready(review(x, channel, sizes))

    # Pallas kernel path (run the kernel once).
    out_pallas = jax.block_until_ready(review_pallas(x, channel, sizes))

    assert out_fast.shape == (batch, channel, sizes[0], sizes[1])
    assert out_pallas.shape == (batch, channel, sizes[0], sizes[1])
    assert out_pallas.dtype == x.dtype
    assert bool(jnp.array_equal(out_fast, ref))
    assert bool(jnp.array_equal(out_pallas, ref))

    print("KERNEL_OK")
</pallas_src>

<mosaic_0001>
module attributes {stable_mosaic.version = 11 : i64} {
  func.func @_copy_kernel(%arg0: i32, %arg1: memref<8x256xf32, #tpu.memory_space<vmem>>, %arg2: memref<8x256xf32, #tpu.memory_space<vmem>>) attributes {dimension_semantics = [#tpu.dimension_semantics<parallel>], iteration_bounds = array<i64: 1>, scalar_prefetch = 0 : i64, scratch_operands = 0 : i64, tpu.core_type = #tpu.core_type<tc>, window_params = [{transform_indices = @transform_0, window_bounds = array<i64: 8, 256>}, {transform_indices = @transform_1, window_bounds = array<i64: 8, 256>}]} {
    %c0 = arith.constant 0 : index
    %c0_0 = arith.constant 0 : index
    %0 = vector.load %arg1[%c0, %c0_0] : memref<8x256xf32, #tpu.memory_space<vmem>>, vector<8x256xf32>
    %c0_1 = arith.constant 0 : index
    %c0_2 = arith.constant 0 : index
    %1 = vector.load %arg2[%c0_1, %c0_2] : memref<8x256xf32, #tpu.memory_space<vmem>>, vector<8x256xf32>
    tpu.vector_store %arg2[%c0_1, %c0_2], %0 {strides = array<i32>} : memref<8x256xf32, #tpu.memory_space<vmem>>, vector<8x256xf32>,
    return
  }
  func.func @transform_0(%arg0: i32) -> (i32, i32) {
    %c0_i32 = arith.constant 0 : i32
    %c0_i32_0 = arith.constant 0 : i32
    return %arg0, %c0_i32 : i32, i32
  }
  func.func @transform_1(%arg0: i32) -> (i32, i32) {
    %c0_i32 = arith.constant 0 : i32
    %c0_i32_0 = arith.constant 0 : i32
    return %arg0, %c0_i32 : i32, i32
  }
}

</mosaic_0001>

<llo_original>
// kernel: tpu_custom_call.1
$region0: #{tpu_custom_call.1}
  #allocation0 [shape = 'u32[]', space=smem, size = 0x4, offset = 0x4, fixed_abs, tag = 'smem constant byte address 0x4 - core index']
  #allocation1 [shape = 'u32[144,128]{1,0:T(1,128)}', space=vmem, size = 0x12000, scoped, tag = 'internal scratch']
  %s0 = inlined_call_operand.hbm [shape: f32[8,256], index: 0, kind: input, shape index: {}, may-alias: {0,1}]
  %s1 = inlined_call_operand.hbm [shape: f32[8,256], index: 1, kind: output, shape index: {}, may-alias: {0,1}]
  %s2 = sld [smem:[#allocation0]]
  $region18: #{tpu_custom_call.1} parent=0
    _
  %s4 = ssub.s32 1, %s2
  %s5 = scalar_select 0, %s4, %s2
  $region1: #{tpu_custom_call.1} parent=0
    #allocation2 [shape = 'u8[8192]{0}', space=vmem, size = 0x2000, scoped, tag = 'input window, operand 0, single buffered']
    #allocation3 [shape = 's32[1]{0}', space=sflag, size = 0x4, scoped, tag = 'scoped memory for tpu_custom_call.1']
    #allocation4 [shape = 's32[1]{0}', space=sflag, size = 0x4, scoped, tag = 'scoped memory for tpu_custom_call.1']
    #allocation5 [shape = 'u8[8192]{0}', space=vmem, size = 0x2000, scoped, tag = 'output window, operand 0, single buffered']
    %6 = vsyncpa [#allocation3], 0
    %7 = vsyncpa [#allocation4], 0
    // Predicated region
    $region2: #{tpu_custom_call.1} parent=1 // pred_check
      _
    $region3: #{tpu_custom_call.1} parent=1 // pred_check_branch
      %9 = sbr.rel (0) target = $region5
    $region4: #{tpu_custom_call.1} parent=1 // pred_region
      %s11 = ssub.s32 256, 256
      %12 = vsyncadd [#allocation3], %s11
      %s14 = sshll.u32 [#allocation2], 4
      %s15 = int_to_ptr.vmem [resolvable:$true] %s14
      %17 = dma.hbm_to_vmem [thread:$0]  %s0, 256, %s15, [#allocation3]
    $region5: #{tpu_custom_call.1} parent=1 // pred_fallthru
      _
    // Predicated region
    $region6: #{tpu_custom_call.1} parent=1 // pred_check
      _
    $region7: #{tpu_custom_call.1} parent=1 // pred_check_branch
      %19 = sbr.rel (0) target = $region9
    $region8: #{tpu_custom_call.1} parent=1 // pred_region
      %20 = dma.done [#allocation3], 256
    $region9: #{tpu_custom_call.1} parent=1 // pred_fallthru
      _
    %v21 = vld [vmem:[#allocation2] sm:$0xff]
    %v22 = vld [vmem:[#allocation2 + $0x8] sm:$0xff]
    %23 = vst [vmem:[#allocation5] sm:$0xff] %v21
    %24 = vst [vmem:[#allocation5 + $0x8] sm:$0xff] %v22
    // Predicated region
    $region10: #{tpu_custom_call.1} parent=1 // pred_check
      _
    $region11: #{tpu_custom_call.1} parent=1 // pred_check_branch
      %26 = sbr.rel (0) target = $region13
    $region12: #{tpu_custom_call.1} parent=1 // pred_region
      %s28 = ssub.s32 256, 256
      %29 = vsyncadd [#allocation4], %s28
      %s31 = sshll.u32 [#allocation5], 4
      %s32 = int_to_ptr.vmem [resolvable:$true] %s31
      %34 = dma.vmem_to_hbm [thread:$0]  %s32, 256, %s1, [#allocation4]
    $region13: #{tpu_custom_call.1} parent=1 // pred_fallthru
      _
    // Predicated region
    $region14: #{tpu_custom_call.1} parent=1 // pred_check
      _
    $region15: #{tpu_custom_call.1} parent=1 // pred_check_branch
      %36 = sbr.rel (0) target = $region17
    $region16: #{tpu_custom_call.1} parent=1 // pred_region
      %37 = dma.done [#allocation4], 256
    $region17: #{tpu_custom_call.1} parent=1 // pred_fallthru
      _
    %38 = vsyncpa [#allocation3], 1
    %39 = vsyncpa [#allocation4], 1

</llo_original>
